<compile_context>
chip_gen: v7x
topology: tpu7x:2x2x1
jax: 0.10.0
libtpu: 0.0.40
codegen_flags: <defaults>
</compile_context>

<pallas_src>
import jax
import jax.numpy as jnp
from jax.experimental import pallas as pl
from jax.experimental.pallas import tpu as pltpu


def _make_fp_kernel(num_layers: int, has_points1: bool, C: int, S: int):
    """Builds the per-(batch, N-tile) feature-propagation kernel."""

    def kernel(*refs):
        it = iter(refs)
        xyz1_ref = next(it)                            # (1, C, TILE_N) f32 channels-major
        xyz2_ref = next(it)                            # (1, S, C)      f32 points-major
        sq2_ref = next(it)                             # (1, S, 1)      f32 precomputed |xyz2|^2
        pts1_ref = next(it) if has_points1 else None   # (1, D1, TILE_N) f32
        pts2_ref = next(it)                            # (1, D2, S)      f32
        if has_points1:
            w1a_ref = next(it)                         # (C1, D1) bf16
            w1b_ref = next(it)                         # (C1, D2) bf16
        else:
            w1_ref = next(it)                          # (C1, D2) bf16
        b1_ref = next(it)                              # (C1, 1) f32
        rest = [next(it) for _ in range(2 * (num_layers - 1))]
        out_ref = next(it)                             # (1, Dout, TILE_N) f32

        x1 = xyz1_ref[0]                               # [C, TILE_N] f32
        x2 = xyz2_ref[0]                               # [S, C]      f32

        # --- squared pairwise distances [S, TILE_N] via C unrolled VPU FMAs ---
        r = x1[0:1, :]                                 # [1, TILE_N]
        sq1 = r * r
        cross = x2[:, 0:1] * r                         # [S, TILE_N]
        for c in range(1, C):
            r = x1[c:c + 1, :]
            sq1 = sq1 + r * r
            cross = cross + x2[:, c:c + 1] * r
        # clamp: cancellation can make the expansion slightly negative
        dist = jnp.maximum(sq2_ref[0] + sq1 - 2.0 * cross, 0.0)   # [S, TILE_N]

        # --- 3-NN (iterative masked argmin over sublane/S axis) --------------
        row = jax.lax.broadcasted_iota(jnp.int32, dist.shape, 0)
        BIG = jnp.float32(1e30)
        work = dist
        w_raw = jnp.zeros_like(dist)                   # [S, TILE_N]
        norm = jnp.zeros_like(sq1)                     # [1, TILE_N]
        for _ in range(3):
            mn = jnp.min(work, axis=0, keepdims=True)           # [1, TILE_N]
            cand = jnp.where(work == mn, row, S)                # lowest index on ties
            idx = jnp.min(cand, axis=0, keepdims=True)          # [1, TILE_N]
            sel = row == idx                                    # exactly-one one-hot
            recip = pl.reciprocal(mn + 1e-8, approx=True)       # EUP slot
            w_raw = w_raw + jnp.where(sel, recip, 0.0)
            norm = norm + recip
            work = jnp.where(sel, BIG, work)                    # mask chosen point
        inv_norm = pl.reciprocal(norm, approx=True)             # [1, TILE_N]

        # --- interpolation: bf16 MXU, normalization folded after the matmul --
        p2b = pts2_ref[0].astype(jnp.bfloat16)                  # [D2, S]
        interp = jnp.dot(p2b, w_raw.astype(jnp.bfloat16),
                         preferred_element_type=jnp.float32) * inv_norm
        interp_b = interp.astype(jnp.bfloat16)                  # [D2, TILE_N]

        # --- layer 1: channel concat folded into two matmuls -----------------
        if has_points1:
            p1b = pts1_ref[0].astype(jnp.bfloat16)              # [D1, TILE_N]
            acc = jnp.dot(w1a_ref[...], p1b, preferred_element_type=jnp.float32)
            acc = acc + jnp.dot(w1b_ref[...], interp_b,
                                preferred_element_type=jnp.float32)
        else:
            acc = jnp.dot(w1_ref[...], interp_b,
                          preferred_element_type=jnp.float32)
        feat = jnp.maximum(acc + b1_ref[...], 0.0)              # [C1, TILE_N]

        # --- remaining layers: relu(W @ x + b), bf16 operands, f32 acc -------
        for l in range(num_layers - 1):
            W = rest[2 * l][...]
            b = rest[2 * l + 1][...]
            feat = jnp.maximum(
                jnp.dot(W, feat.astype(jnp.bfloat16),
                        preferred_element_type=jnp.float32) + b, 0.0)

        out_ref[0] = feat.astype(out_ref.dtype)

    return kernel


def _choose_tile_n(N, B, S, tile_n):
    """TILE_N policy: multiple of 128 when tiled, bounded for v7x VMEM and
    balanced across v7x's two TensorCores when the grid would be tiny."""
    assert tile_n % 128 == 0 and tile_n >= 128
    if N <= tile_n:
        if B == 1 and N >= 256:
            half = (N + 1) // 2
            return ((half + 127) // 128) * 128      # 2 grid steps -> both TCs busy
        return N                                    # single block == full dim
    t = tile_n
    # bound the ~6 live [S, t] f32 3-NN intermediates (v7x has 64 MiB VMEM)
    while t > 128 and 6 * t * S * 4 > (8 << 20):
        t = max(128, (t // 2) // 128 * 128)
    return t


def _prepare_layer_inputs(layer_params, has_points1, D1):
    """Casts folded (W [Cout, Cin], b [Cout]) params for the kernel: weights to
    bf16 (layer 1 split for the folded concat), biases to f32 [Cout, 1]."""
    inputs = []
    for l, (W, bvec) in enumerate(layer_params):
        W = jnp.asarray(W, jnp.float32)                        # [Cout, Cin]
        Cout = W.shape[0]
        b = jnp.asarray(bvec, jnp.float32).reshape(Cout, 1)
        if l == 0 and has_points1:
            inputs += [W[:, :D1].astype(jnp.bfloat16),         # points1 part
                       W[:, D1:].astype(jnp.bfloat16),         # interpolated part
                       b]
        else:
            inputs += [W.astype(jnp.bfloat16), b]
    specs = [pl.BlockSpec(a.shape, lambda bi, ni: (0, 0)) for a in inputs]
    return inputs, specs


def pointnet_feature_propagation(xyz1, xyz2, points1, points2, layer_params,
                                 *, tile_n=512):
    """Matches PointNetFeaturePropagation.forward (S > 1 branch, eval-mode BN).

    Args:
      xyz1:    [B, 3, N]  positions of dense points
      xyz2:    [B, 3, S]  positions of sparse points (S >= 3)
      points1: [B, D1, N] or None
      points2: [B, D2, S]
      layer_params: list of (W [Cout, Cin], b [Cout]) folded conv+BN params.
    Returns:
      [B, Dout, N]
    """
    B, C, N = xyz1.shape
    S = xyz2.shape[2]
    # TODO(synk): the S == 1 broadcast branch of the reference is not implemented.
    assert S >= 3, "kernel implements the 3-NN interpolation branch (needs S >= 3)"

    has_points1 = points1 is not None

    xyz1 = jnp.asarray(xyz1, jnp.float32)                        # [B, C, N]
    xyz2f = jnp.asarray(xyz2, jnp.float32)
    xyz2p = jnp.transpose(xyz2f, (0, 2, 1))                      # [B, S, C] (tiny)
    sq2 = jnp.sum(xyz2f * xyz2f, axis=1)[:, :, None]             # [B, S, 1]
    pts2 = jnp.asarray(points2, jnp.float32)                     # [B, D2, S]
    D2 = pts2.shape[1]
    if has_points1:
        pts1 = jnp.asarray(points1, jnp.float32)                 # [B, D1, N] (native)
        D1 = pts1.shape[1]
    else:
        pts1, D1 = None, 0
    assert layer_params[0][0].shape[1] == D1 + D2

    TILE_N = _choose_tile_n(N, B, S, tile_n)
    n_tiles = pl.cdiv(N, TILE_N)                                 # ragged last block OK

    inputs = [xyz1, xyz2p, sq2]
    in_specs = [
        pl.BlockSpec((1, C, TILE_N), lambda b, n: (b, 0, n)),    # tiled over N
        pl.BlockSpec((1, S, C), lambda b, n: (b, 0, 0)),         # resident per batch
        pl.BlockSpec((1, S, 1), lambda b, n: (b, 0, 0)),         # resident per batch
    ]
    if has_points1:
        inputs.append(pts1)
        in_specs.append(pl.BlockSpec((1, D1, TILE_N), lambda b, n: (b, 0, n)))
    inputs.append(pts2)
    in_specs.append(pl.BlockSpec((1, D2, S), lambda b, n: (b, 0, 0)))

    layer_inputs, layer_specs = _prepare_layer_inputs(layer_params, has_points1, D1)
    inputs += layer_inputs
    in_specs += layer_specs
    dout = layer_params[-1][0].shape[0]

    kernel = _make_fp_kernel(len(layer_params), has_points1, C, S)

    out = pl.pallas_call(
        kernel,
        out_shape=jax.ShapeDtypeStruct((B, dout, N), jnp.float32),
        grid=(B, n_tiles),
        in_specs=in_specs,
        out_specs=pl.BlockSpec((1, dout, TILE_N), lambda b, n: (b, 0, n)),
        compiler_params=pltpu.CompilerParams(
            dimension_semantics=("parallel", "parallel")),
    )(*inputs)
    return out                                                   # [B, Dout, N]


def init_folded_params(key, in_channel, mlp):
    """Deterministic Conv1d(k=1)+BatchNorm1d(eval) params, folded to (W, b)
    with W in the PyTorch-native [Cout, Cin] (channels-major) layout."""
    params = []
    last = in_channel
    eps = 1e-5
    for out_ch in mlp:
        key, k_w, k_b = jax.random.split(key, 3)
        bound = 1.0 / jnp.sqrt(jnp.float32(last))
        W = jax.random.uniform(k_w, (out_ch, last), jnp.float32, -bound, bound)
        b = jax.random.uniform(k_b, (out_ch,), jnp.float32, -bound, bound)
        # Fresh BatchNorm1d: gamma=1, beta=0, running_mean=0, running_var=1 (eval).
        gamma = jnp.ones((out_ch,), jnp.float32)
        beta = jnp.zeros((out_ch,), jnp.float32)
        mean = jnp.zeros((out_ch,), jnp.float32)
        var = jnp.ones((out_ch,), jnp.float32)
        scale = gamma / jnp.sqrt(var + eps)
        eff_W = W * scale[:, None]                  # [Cout, Cin]
        eff_b = (b - mean) * scale + beta           # [Cout]
        params.append((eff_W, eff_b))
        last = out_ch
    return params


if __name__ == "__main__":
    key = jax.random.PRNGKey(0)
    B, N, S = 2, 64, 16
    D1, D2 = 16, 32
    mlp = [64, 32]
    in_channel = D1 + D2

    k1, k2, k3, k4, kp = jax.random.split(key, 5)
    xyz1 = jax.random.normal(k1, (B, 3, N), jnp.float32)
    xyz2 = jax.random.normal(k2, (B, 3, S), jnp.float32)
    points1 = jax.random.normal(k3, (B, D1, N), jnp.float32)
    points2 = jax.random.normal(k4, (B, D2, S), jnp.float32)

    layer_params = init_folded_params(kp, in_channel, mlp)

    out = pointnet_feature_propagation(xyz1, xyz2, points1, points2, layer_params)
    out = jax.block_until_ready(out)
    assert out.shape == (B, mlp[-1], N)
    print("KERNEL_OK")
</pallas_src>

<mosaic_0001>
module attributes {stable_mosaic.version = 11 : i64} {
  func.func @kernel(%arg0: i32, %arg1: i32, %arg2: memref<1x3x64xf32, #tpu.memory_space<vmem>>, %arg3: memref<1x16x3xf32, #tpu.memory_space<vmem>>, %arg4: memref<1x16x1xf32, #tpu.memory_space<vmem>>, %arg5: memref<1x16x64xf32, #tpu.memory_space<vmem>>, %arg6: memref<1x32x16xf32, #tpu.memory_space<vmem>>, %arg7: memref<64x16xbf16, #tpu.memory_space<vmem>>, %arg8: memref<64x32xbf16, #tpu.memory_space<vmem>>, %arg9: memref<64x1xf32, #tpu.memory_space<vmem>>, %arg10: memref<32x64xbf16, #tpu.memory_space<vmem>>, %arg11: memref<32x1xf32, #tpu.memory_space<vmem>>, %arg12: memref<1x32x64xf32, #tpu.memory_space<vmem>>) attributes {dimension_semantics = [#tpu.dimension_semantics<parallel>, #tpu.dimension_semantics<parallel>], iteration_bounds = array<i64: 2, 1>, scalar_prefetch = 0 : i64, scratch_operands = 0 : i64, tpu.core_type = #tpu.core_type<tc>, window_params = [{transform_indices = @transform_0, window_bounds = array<i64: 1, 3, 64>}, {transform_indices = @transform_1, window_bounds = array<i64: 1, 16, 3>}, {transform_indices = @transform_2, window_bounds = array<i64: 1, 16, 1>}, {transform_indices = @transform_3, window_bounds = array<i64: 1, 16, 64>}, {transform_indices = @transform_4, window_bounds = array<i64: 1, 32, 16>}, {pipeline_mode = #tpu.pipeline_mode<synchronous>, transform_indices = @transform_5, window_bounds = array<i64: 64, 16>}, {pipeline_mode = #tpu.pipeline_mode<synchronous>, transform_indices = @transform_6, window_bounds = array<i64: 64, 32>}, {pipeline_mode = #tpu.pipeline_mode<synchronous>, transform_indices = @transform_7, window_bounds = array<i64: 64, 1>}, {pipeline_mode = #tpu.pipeline_mode<synchronous>, transform_indices = @transform_8, window_bounds = array<i64: 32, 64>}, {pipeline_mode = #tpu.pipeline_mode<synchronous>, transform_indices = @transform_9, window_bounds = array<i64: 32, 1>}, {transform_indices = @transform_10, window_bounds = array<i64: 1, 32, 64>}]} {
    %c0 = arith.constant 0 : index
    %c0_0 = arith.constant 0 : index
    %c0_1 = arith.constant 0 : index
    %0 = vector.load %arg2[%c0, %c0_0, %c0_1] : memref<1x3x64xf32, #tpu.memory_space<vmem>>, vector<1x3x64xf32>
    %1 = vector.shape_cast %0 : vector<1x3x64xf32> to vector<3x64xf32>
    %c0_2 = arith.constant 0 : index
    %c0_3 = arith.constant 0 : index
    %c0_4 = arith.constant 0 : index
    %2 = vector.load %arg3[%c0_2, %c0_3, %c0_4] : memref<1x16x3xf32, #tpu.memory_space<vmem>>, vector<1x16x3xf32>
    %3 = vector.shape_cast %2 : vector<1x16x3xf32> to vector<16x3xf32>
    %4 = vector.extract_strided_slice %1 {offsets = [0, 0], sizes = [1, 64], strides = [1, 1]} : vector<3x64xf32> to vector<1x64xf32>
    %5 = arith.mulf %4, %4 : vector<1x64xf32>
    %6 = vector.extract_strided_slice %3 {offsets = [0, 0], sizes = [16, 1], strides = [1, 1]} : vector<16x3xf32> to vector<16x1xf32>
    %7 = vector.broadcast %6 : vector<16x1xf32> to vector<16x64xf32>
    %8 = vector.broadcast %4 : vector<1x64xf32> to vector<16x64xf32>
    %9 = arith.mulf %7, %8 : vector<16x64xf32>
    %10 = vector.extract_strided_slice %1 {offsets = [1, 0], sizes = [1, 64], strides = [1, 1]} : vector<3x64xf32> to vector<1x64xf32>
    %11 = arith.mulf %10, %10 : vector<1x64xf32>
    %12 = arith.addf %5, %11 : vector<1x64xf32>
    %13 = vector.extract_strided_slice %3 {offsets = [0, 1], sizes = [16, 1], strides = [1, 1]} : vector<16x3xf32> to vector<16x1xf32>
    %14 = vector.broadcast %13 : vector<16x1xf32> to vector<16x64xf32>
    %15 = vector.broadcast %10 : vector<1x64xf32> to vector<16x64xf32>
    %16 = arith.mulf %14, %15 : vector<16x64xf32>
    %17 = arith.addf %9, %16 : vector<16x64xf32>
    %18 = vector.extract_strided_slice %1 {offsets = [2, 0], sizes = [1, 64], strides = [1, 1]} : vector<3x64xf32> to vector<1x64xf32>
    %19 = arith.mulf %18, %18 : vector<1x64xf32>
    %20 = arith.addf %12, %19 : vector<1x64xf32>
    %21 = vector.extract_strided_slice %3 {offsets = [0, 2], sizes = [16, 1], strides = [1, 1]} : vector<16x3xf32> to vector<16x1xf32>
    %22 = vector.broadcast %21 : vector<16x1xf32> to vector<16x64xf32>
    %23 = vector.broadcast %18 : vector<1x64xf32> to vector<16x64xf32>
    %24 = arith.mulf %22, %23 : vector<16x64xf32>
    %25 = arith.addf %17, %24 : vector<16x64xf32>
    %c0_5 = arith.constant 0 : index
    %c0_6 = arith.constant 0 : index
    %c0_7 = arith.constant 0 : index
    %26 = vector.load %arg4[%c0_5, %c0_6, %c0_7] : memref<1x16x1xf32, #tpu.memory_space<vmem>>, vector<1x16x1xf32>
    %27 = vector.shape_cast %26 : vector<1x16x1xf32> to vector<16x1xf32>
    %28 = vector.broadcast %27 : vector<16x1xf32> to vector<16x64xf32>
    %29 = vector.broadcast %20 : vector<1x64xf32> to vector<16x64xf32>
    %30 = arith.addf %28, %29 : vector<16x64xf32>
    %cst = arith.constant 2.000000e+00 : f32
    %31 = vector.broadcast %cst : f32 to vector<16x64xf32>
    %32 = arith.mulf %31, %25 : vector<16x64xf32>
    %33 = arith.subf %30, %32 : vector<16x64xf32>
    %cst_8 = arith.constant 0.000000e+00 : f32
    %34 = vector.broadcast %cst_8 : f32 to vector<16x64xf32>
    %35 = arith.maximumf %33, %34 : vector<16x64xf32>
    %36 = tpu.iota {dimensions = array<i32: 0>} : vector<16x64xi32>
    %cst_9 = arith.constant 0.000000e+00 : f32
    %37 = vector.broadcast %cst_9 : f32 to vector<16x64xf32>
    %cst_10 = arith.constant 0.000000e+00 : f32
    %38 = vector.broadcast %cst_10 : f32 to vector<1x64xf32>
    %cst_11 = arith.constant dense<0x7F800000> : vector<64xf32>
    %39 = vector.multi_reduction <minimumf>, %35, %cst_11 [0] : vector<16x64xf32> to vector<64xf32>
    %40 = vector.shape_cast %39 : vector<64xf32> to vector<1x64xf32>
    %41 = vector.broadcast %40 : vector<1x64xf32> to vector<16x64xf32>
    %42 = arith.cmpf oeq, %35, %41 : vector<16x64xf32>
    %c16_i32 = arith.constant 16 : i32
    %43 = vector.broadcast %c16_i32 : i32 to vector<16x64xi32>
    %44 = arith.select %42, %36, %43 : vector<16x64xi1>, vector<16x64xi32>
    %cst_12 = arith.constant dense<2147483647> : vector<64xi32>
    %45 = vector.multi_reduction <minsi>, %44, %cst_12 [0] : vector<16x64xi32> to vector<64xi32>
    %46 = vector.shape_cast %45 : vector<64xi32> to vector<1x64xi32>
    %47 = vector.broadcast %46 : vector<1x64xi32> to vector<16x64xi32>
    %48 = arith.cmpi eq, %36, %47 : vector<16x64xi32>
    %cst_13 = arith.constant 9.99999993E-9 : f32
    %49 = vector.broadcast %cst_13 : f32 to vector<1x64xf32>
    %50 = arith.addf %40, %49 : vector<1x64xf32>
    %51 = tpu.reciprocal %50 {approx = true} : vector<1x64xf32> -> vector<1x64xf32>
    %cst_14 = arith.constant 0.000000e+00 : f32
    %52 = vector.shape_cast %51 : vector<1x64xf32> to vector<1x64xf32>
    %53 = vector.broadcast %52 : vector<1x64xf32> to vector<16x64xf32>
    %54 = vector.broadcast %cst_14 : f32 to vector<16x64xf32>
    %55 = arith.select %48, %53, %54 : vector<16x64xi1>, vector<16x64xf32>
    %56 = arith.addf %37, %55 : vector<16x64xf32>
    %57 = arith.addf %38, %51 : vector<1x64xf32>
    %cst_15 = arith.constant 1.000000e+30 : f32
    %58 = vector.broadcast %cst_15 : f32 to vector<16x64xf32>
    %59 = arith.select %48, %58, %35 : vector<16x64xi1>, vector<16x64xf32>
    %cst_16 = arith.constant dense<0x7F800000> : vector<64xf32>
    %60 = vector.multi_reduction <minimumf>, %59, %cst_16 [0] : vector<16x64xf32> to vector<64xf32>
    %61 = vector.shape_cast %60 : vector<64xf32> to vector<1x64xf32>
    %62 = vector.broadcast %61 : vector<1x64xf32> to vector<16x64xf32>
    %63 = arith.cmpf oeq, %59, %62 : vector<16x64xf32>
    %c16_i32_17 = arith.constant 16 : i32
    %64 = vector.broadcast %c16_i32_17 : i32 to vector<16x64xi32>
    %65 = arith.select %63, %36, %64 : vector<16x64xi1>, vector<16x64xi32>
    %cst_18 = arith.constant dense<2147483647> : vector<64xi32>
    %66 = vector.multi_reduction <minsi>, %65, %cst_18 [0] : vector<16x64xi32> to vector<64xi32>
    %67 = vector.shape_cast %66 : vector<64xi32> to vector<1x64xi32>
    %68 = vector.broadcast %67 : vector<1x64xi32> to vector<16x64xi32>
    %69 = arith.cmpi eq, %36, %68 : vector<16x64xi32>
    %cst_19 = arith.constant 9.99999993E-9 : f32
    %70 = vector.broadcast %cst_19 : f32 to vector<1x64xf32>
    %71 = arith.addf %61, %70 : vector<1x64xf32>
    %72 = tpu.reciprocal %71 {approx = true} : vector<1x64xf32> -> vector<1x64xf32>
    %cst_20 = arith.constant 0.000000e+00 : f32
    %73 = vector.shape_cast %72 : vector<1x64xf32> to vector<1x64xf32>
    %74 = vector.broadcast %73 : vector<1x64xf32> to vector<16x64xf32>
    %75 = vector.broadcast %cst_20 : f32 to vector<16x64xf32>
    %76 = arith.select %69, %74, %75 : vector<16x64xi1>, vector<16x64xf32>
    %77 = arith.addf %56, %76 : vector<16x64xf32>
    %78 = arith.addf %57, %72 : vector<1x64xf32>
    %cst_21 = arith.constant 1.000000e+30 : f32
    %79 = vector.broadcast %cst_21 : f32 to vector<16x64xf32>
    %80 = arith.select %69, %79, %59 : vector<16x64xi1>, vector<16x64xf32>
    %cst_22 = arith.constant dense<0x7F800000> : vector<64xf32>
    %81 = vector.multi_reduction <minimumf>, %80, %cst_22 [0] : vector<16x64xf32> to vector<64xf32>
    %82 = vector.shape_cast %81 : vector<64xf32> to vector<1x64xf32>
    %83 = vector.broadcast %82 : vector<1x64xf32> to vector<16x64xf32>
    %84 = arith.cmpf oeq, %80, %83 : vector<16x64xf32>
    %c16_i32_23 = arith.constant 16 : i32
    %85 = vector.broadcast %c16_i32_23 : i32 to vector<16x64xi32>
    %86 = arith.select %84, %36, %85 : vector<16x64xi1>, vector<16x64xi32>
    %cst_24 = arith.constant dense<2147483647> : vector<64xi32>
    %87 = vector.multi_reduction <minsi>, %86, %cst_24 [0] : vector<16x64xi32> to vector<64xi32>
    %88 = vector.shape_cast %87 : vector<64xi32> to vector<1x64xi32>
    %89 = vector.broadcast %88 : vector<1x64xi32> to vector<16x64xi32>
    %90 = arith.cmpi eq, %36, %89 : vector<16x64xi32>
    %cst_25 = arith.constant 9.99999993E-9 : f32
    %91 = vector.broadcast %cst_25 : f32 to vector<1x64xf32>
    %92 = arith.addf %82, %91 : vector<1x64xf32>
    %93 = tpu.reciprocal %92 {approx = true} : vector<1x64xf32> -> vector<1x64xf32>
    %cst_26 = arith.constant 0.000000e+00 : f32
    %94 = vector.shape_cast %93 : vector<1x64xf32> to vector<1x64xf32>
    %95 = vector.broadcast %94 : vector<1x64xf32> to vector<16x64xf32>
    %96 = vector.broadcast %cst_26 : f32 to vector<16x64xf32>
    %97 = arith.select %90, %95, %96 : vector<16x64xi1>, vector<16x64xf32>
    %98 = arith.addf %77, %97 : vector<16x64xf32>
    %99 = arith.addf %78, %93 : vector<1x64xf32>
    %100 = tpu.reciprocal %99 {approx = true} : vector<1x64xf32> -> vector<1x64xf32>
    %c0_27 = arith.constant 0 : index
    %c0_28 = arith.constant 0 : index
    %c0_29 = arith.constant 0 : index
    %101 = vector.load %arg6[%c0_27, %c0_28, %c0_29] : memref<1x32x16xf32, #tpu.memory_space<vmem>>, vector<1x32x16xf32>
    %102 = vector.shape_cast %101 : vector<1x32x16xf32> to vector<32x16xf32>
    %103 = arith.truncf %102 : vector<32x16xf32> to vector<32x16xbf16>
    %104 = arith.truncf %98 : vector<16x64xf32> to vector<16x64xbf16>
    %cst_30 = arith.constant dense<0.000000e+00> : vector<32x64xf32>
    %105 = tpu.matmul %103, %104, %cst_30 {dimension_numbers = #tpu.dot_dimension_numbers<[1], [0], [0], [1], [0, 0, 1, 1], [], []>} : vector<32x16xbf16>, vector<16x64xbf16>, vector<32x64xf32> -> vector<32x64xf32>
    %106 = vector.broadcast %100 : vector<1x64xf32> to vector<32x64xf32>
    %107 = arith.mulf %105, %106 : vector<32x64xf32>
    %108 = arith.truncf %107 : vector<32x64xf32> to vector<32x64xbf16>
    %c0_31 = arith.constant 0 : index
    %c0_32 = arith.constant 0 : index
    %c0_33 = arith.constant 0 : index
    %109 = vector.load %arg5[%c0_31, %c0_32, %c0_33] : memref<1x16x64xf32, #tpu.memory_space<vmem>>, vector<1x16x64xf32>
    %110 = vector.shape_cast %109 : vector<1x16x64xf32> to vector<16x64xf32>
    %111 = arith.truncf %110 : vector<16x64xf32> to vector<16x64xbf16>
    %c0_34 = arith.constant 0 : index
    %c0_35 = arith.constant 0 : index
    %112 = vector.load %arg7[%c0_34, %c0_35] : memref<64x16xbf16, #tpu.memory_space<vmem>>, vector<64x16xbf16>
    %cst_36 = arith.constant dense<0.000000e+00> : vector<64x64xf32>
    %113 = tpu.matmul %112, %111, %cst_36 {dimension_numbers = #tpu.dot_dimension_numbers<[1], [0], [0], [1], [0, 0, 1, 1], [], []>} : vector<64x16xbf16>, vector<16x64xbf16>, vector<64x64xf32> -> vector<64x64xf32>
    %c0_37 = arith.constant 0 : index
    %c0_38 = arith.constant 0 : index
    %114 = vector.load %arg8[%c0_37, %c0_38] : memref<64x32xbf16, #tpu.memory_space<vmem>>, vector<64x32xbf16>
    %cst_39 = arith.constant dense<0.000000e+00> : vector<64x64xf32>
    %115 = tpu.matmul %114, %108, %cst_39 {dimension_numbers = #tpu.dot_dimension_numbers<[1], [0], [0], [1], [0, 0, 1, 1], [], []>} : vector<64x32xbf16>, vector<32x64xbf16>, vector<64x64xf32> -> vector<64x64xf32>
    %116 = arith.addf %113, %115 : vector<64x64xf32>
    %c0_40 = arith.constant 0 : index
    %c0_41 = arith.constant 0 : index
    %117 = vector.load %arg9[%c0_40, %c0_41] : memref<64x1xf32, #tpu.memory_space<vmem>>, vector<64x1xf32>
    %118 = vector.broadcast %117 : vector<64x1xf32> to vector<64x64xf32>
    %119 = arith.addf %116, %118 : vector<64x64xf32>
    %cst_42 = arith.constant 0.000000e+00 : f32
    %120 = vector.broadcast %cst_42 : f32 to vector<64x64xf32>
    %121 = arith.maximumf %119, %120 : vector<64x64xf32>
    %c0_43 = arith.constant 0 : index
    %c0_44 = arith.constant 0 : index
    %122 = vector.load %arg10[%c0_43, %c0_44] : memref<32x64xbf16, #tpu.memory_space<vmem>>, vector<32x64xbf16>
    %c0_45 = arith.constant 0 : index
    %c0_46 = arith.constant 0 : index
    %123 = vector.load %arg11[%c0_45, %c0_46] : memref<32x1xf32, #tpu.memory_space<vmem>>, vector<32x1xf32>
    %124 = arith.truncf %121 : vector<64x64xf32> to vector<64x64xbf16>
    %cst_47 = arith.constant dense<0.000000e+00> : vector<32x64xf32>
    %125 = tpu.matmul %122, %124, %cst_47 {dimension_numbers = #tpu.dot_dimension_numbers<[1], [0], [0], [1], [0, 0, 1, 1], [], []>} : vector<32x64xbf16>, vector<64x64xbf16>, vector<32x64xf32> -> vector<32x64xf32>
    %126 = vector.broadcast %123 : vector<32x1xf32> to vector<32x64xf32>
    %127 = arith.addf %125, %126 : vector<32x64xf32>
    %cst_48 = arith.constant 0.000000e+00 : f32
    %128 = vector.broadcast %cst_48 : f32 to vector<32x64xf32>
    %129 = arith.maximumf %127, %128 : vector<32x64xf32>
    %c0_49 = arith.constant 0 : index
    %c0_50 = arith.constant 0 : index
    %c0_51 = arith.constant 0 : index
    %130 = vector.load %arg12[%c0_49, %c0_50, %c0_51] : memref<1x32x64xf32, #tpu.memory_space<vmem>>, vector<1x32x64xf32>
    %131 = vector.shape_cast %130 : vector<1x32x64xf32> to vector<32x64xf32>
    %132 = vector.shape_cast %129 : vector<32x64xf32> to vector<1x32x64xf32>
    tpu.vector_store %arg12[%c0_49, %c0_50, %c0_51], %132 {strides = array<i32>} : memref<1x32x64xf32, #tpu.memory_space<vmem>>, vector<1x32x64xf32>,
    return
  }
  func.func @transform_0(%arg0: i32, %arg1: i32) -> (i32, i32, i32) {
    %c0_i32 = arith.constant 0 : i32
    %c0_i32_0 = arith.constant 0 : i32
    return %arg0, %c0_i32, %arg1 : i32, i32, i32
  }
  func.func @transform_1(%arg0: i32, %arg1: i32) -> (i32, i32, i32) {
    %c0_i32 = arith.constant 0 : i32
    %c0_i32_0 = arith.constant 0 : i32
    %c0_i32_1 = arith.constant 0 : i32
    return %arg0, %c0_i32, %c0_i32_0 : i32, i32, i32
  }
  func.func @transform_2(%arg0: i32, %arg1: i32) -> (i32, i32, i32) {
    %c0_i32 = arith.constant 0 : i32
    %c0_i32_0 = arith.constant 0 : i32
    %c0_i32_1 = arith.constant 0 : i32
    return %arg0, %c0_i32, %c0_i32_0 : i32, i32, i32
  }
  func.func @transform_3(%arg0: i32, %arg1: i32) -> (i32, i32, i32) {
    %c0_i32 = arith.constant 0 : i32
    %c0_i32_0 = arith.constant 0 : i32
    return %arg0, %c0_i32, %arg1 : i32, i32, i32
  }
  func.func @transform_4(%arg0: i32, %arg1: i32) -> (i32, i32, i32) {
    %c0_i32 = arith.constant 0 : i32
    %c0_i32_0 = arith.constant 0 : i32
    %c0_i32_1 = arith.constant 0 : i32
    return %arg0, %c0_i32, %c0_i32_0 : i32, i32, i32
  }
  func.func @transform_5(%arg0: i32, %arg1: i32) -> (i32, i32) {
    %c0_i32 = arith.constant 0 : i32
    %c0_i32_0 = arith.constant 0 : i32
    %c0_i32_1 = arith.constant 0 : i32
    return %c0_i32, %c0_i32_0 : i32, i32
  }
  func.func @transform_6(%arg0: i32, %arg1: i32) -> (i32, i32) {
    %c0_i32 = arith.constant 0 : i32
    %c0_i32_0 = arith.constant 0 : i32
    %c0_i32_1 = arith.constant 0 : i32
    return %c0_i32, %c0_i32_0 : i32, i32
  }
  func.func @transform_7(%arg0: i32, %arg1: i32) -> (i32, i32) {
    %c0_i32 = arith.constant 0 : i32
    %c0_i32_0 = arith.constant 0 : i32
    %c0_i32_1 = arith.constant 0 : i32
    return %c0_i32, %c0_i32_0 : i32, i32
  }
  func.func @transform_8(%arg0: i32, %arg1: i32) -> (i32, i32) {
    %c0_i32 = arith.constant 0 : i32
    %c0_i32_0 = arith.constant 0 : i32
    %c0_i32_1 = arith.constant 0 : i32
    return %c0_i32, %c0_i32_0 : i32, i32
  }
  func.func @transform_9(%arg0: i32, %arg1: i32) -> (i32, i32) {
    %c0_i32 = arith.constant 0 : i32
    %c0_i32_0 = arith.constant 0 : i32
    %c0_i32_1 = arith.constant 0 : i32
    return %c0_i32, %c0_i32_0 : i32, i32
  }
  func.func @transform_10(%arg0: i32, %arg1: i32) -> (i32, i32, i32) {
    %c0_i32 = arith.constant 0 : i32
    %c0_i32_0 = arith.constant 0 : i32
    return %arg0, %c0_i32, %arg1 : i32, i32, i32
  }
}

</mosaic_0001>

<llo_original>
// kernel: tpu_custom_call.1
$region0: #{tpu_custom_call.1}
  #allocation0 [shape = 'u32[]', space=smem, size = 0x4, offset = 0x4, fixed_abs, tag = 'smem constant byte address 0x4 - core index']
  #allocation1 [shape = 'u32[144,128]{1,0:T(1,128)}', space=vmem, size = 0x12000, scoped, tag = 'internal scratch']
  %s0 = inlined_call_operand.vmem [shape: f32[2,3,64], index: 0, kind: input, shape index: {}]
  %s1 = inlined_call_operand.vmem [shape: f32[2,16,3], index: 1, kind: input, shape index: {}]
  %s2 = inlined_call_operand.vmem [shape: f32[2,16,1], index: 2, kind: input, shape index: {}]
  %s3 = inlined_call_operand.vmem [shape: f32[2,16,64], index: 3, kind: input, shape index: {}]
  %s4 = inlined_call_operand.vmem [shape: f32[2,32,16], index: 4, kind: input, shape index: {}]
  %s5 = inlined_call_operand.vmem [shape: bf16[64,16], index: 5, kind: input, shape index: {}]
  %s6 = inlined_call_operand.vmem [shape: bf16[64,32], index: 6, kind: input, shape index: {}]
  %s7 = inlined_call_operand.vmem [shape: f32[64,1], index: 7, kind: input, shape index: {}]
  %s8 = inlined_call_operand.vmem [shape: bf16[32,64], index: 8, kind: input, shape index: {}]
  %s9 = inlined_call_operand.vmem [shape: f32[32,1], index: 9, kind: input, shape index: {}]
  %s10 = inlined_call_operand.hbm [shape: f32[2,32,64], index: 10, kind: output, shape index: {}]
  %s11 = sld [smem:[#allocation0]]
  $region73: #{tpu_custom_call.1} parent=0
    _
  %s13 = ssub.s32 1, %s11
  %s14 = scalar_select 0, %s13, %s11
  $region1: #{tpu_custom_call.1} parent=0
    #allocation2 [shape = 'u8[32768]{0}', space=vmem, size = 0x8000, scoped, tag = 'output window, operand 0']
    #allocation3 [shape = 's32[2]{0}', space=sflag, size = 0x8, scoped, tag = 'scoped memory for tpu_custom_call.1']
    %15 = vsyncpa [#allocation3], 0
    %s16 = scalar_lea.sflag [#allocation3], 1
    %17 = vsyncpa %s16, 0
    loop: start=0, step=1, limit=4
    $region2: #{tpu_custom_call.1} parent=1 // loop_pre_header
      _
    $region3: #{tpu_custom_call.1} parent=1 // loop_header
      %s19 = sphi 0, %s23
      %p20 = scmp.ge.s32.totalorder %s19, 4
      %s26 = sphi 0, %s38
      %s27 = sphi 0, %s34
      %s28 = sphi 0, %s26
      %s29 = sphi 0, %s27
      %s30 = sphi 0, %s28
      %s31 = sphi 0, %s29
      %s43 = sphi 0, %s45
      %s46 = sphi 0, %s43
      %s47 = sphi 0, %s46
      %s63 = sphi 0, %s47
      %s69 = sphi 0, %s71
      %s72 = sphi 0, %s69
      %s73 = sphi 0, %s72
      %s89 = sphi 0, %s73
      %s95 = sphi 0, %s97
      %s98 = sphi 0, %s95
      %s99 = sphi 0, %s98
      %s115 = sphi 0, %s99
      %s123 = sphi 0, %s125
      %s126 = sphi 0, %s123
      %s127 = sphi 0, %s126
      %s143 = sphi 0, %s127
      %s149 = sphi 0, %s151
      %s152 = sphi 0, %s149
      %s153 = sphi 0, %s152
      %s169 = sphi 0, %s153
      %s173 = sphi 0, %s173
      %s175 = sphi 0, %s173
      %s176 = sphi 0, %s175
      %s190 = sphi 0, %s176
      %s194 = sphi 0, %s194
      %s196 = sphi 0, %s194
      %s197 = sphi 0, %s196
      %s211 = sphi 0, %s197
      %s215 = sphi 0, %s215
      %s217 = sphi 0, %s215
      %s218 = sphi 0, %s217
      %s232 = sphi 0, %s218
      %s236 = sphi 0, %s236
      %s238 = sphi 0, %s236
      %s239 = sphi 0, %s238
      %s253 = sphi 0, %s239
      %s257 = sphi 0, %s257
      %s259 = sphi 0, %s257
      %s260 = sphi 0, %s259
      %s274 = sphi 0, %s260
      %s282 = sphi 0, %s284
      %s285 = sphi 0, %s282
      %s286 = sphi 0, %s285
      %s302 = sphi 0, %s286
    $region4: #{tpu_custom_call.1} parent=1 // loop_header_branch
      %22 = sbr.rel (%p20) target = $region8
    $region5: #{tpu_custom_call.1} parent=1 // loop_body
      %s24 = ssub.s32 %s19, 1
      %s25 = ssub.s32 %s19, 2
      %s32 = sadd.s32 1, %s27
      %p33 = scmp.ge.s32.totalorder %s32, 1
      %s34 = scalar_select %p33, 0, %s32
      %s35 = sadd.s32 1, %s26
      %s36 = scalar_select %p33, %s35, %s26
      %p37 = scmp.ge.s32.totalorder %s36, 2
      %s38 = scalar_select %p37, 0, %s36
      %s39 = ssub.s32 %s26, %s38
      %s40 = ssub.s32 %s27, %s34
      %s41 = sor.u32 %s39, %s40
      %p42 = scmp.eq.s32.totalorder %s41, 0
      %s44 = sadd.s32 %s43, 1
      %s45 = scalar_select %p42, %s43, %s44
      %p48 = pneg %p42
      %p49 = scmp.eq.s32.totalorder %s19, 1
      %p50 = por %p48, %p49
      %p51 = scmp.ne.s32.totalorder %s43, %s46
      %p52 = scmp.eq.s32.totalorder %s19, 0
      %p53 = por %p51, %p52
      %p54 = scmp.ne.s32.totalorder %s43, %s46
      %p55 = scmp.eq.s32.totalorder %s24, 1
      %p56 = por %p54, %p55
      %p57 = scmp.ne.s32.totalorder %s46, %s47
      %p58 = scmp.eq.s32.totalorder %s24, 0
      %p59 = por %p57, %p58
      %p60 = scmp.ne.s32.totalorder %s46, %s47
      %p61 = scmp.eq.s32.totalorder %s25, 1
      %p62 = por %p60, %p61
      %p64 = scmp.ne.s32.totalorder %s47, %s63
      %p65 = scmp.eq.s32.totalorder %s25, 0
      %p66 = por %p64, %p65
      %s67 = ssub.s32 %s26, %s38
      %p68 = scmp.eq.s32.totalorder %s67, 0
      %s70 = sadd.s32 %s69, 1
      %s71 = scalar_select %p68, %s69, %s70
      %p74 = pneg %p68
      %p75 = scmp.eq.s32.totalorder %s19, 1
      %p76 = por %p74, %p75
      %p77 = scmp.ne.s32.totalorder %s69, %s72
      %p78 = scmp.eq.s32.totalorder %s19, 0
      %p79 = por %p77, %p78
      %p80 = scmp.ne.s32.totalorder %s69, %s72
      %p81 = scmp.eq.s32.totalorder %s24, 1
      %p82 = por %p80, %p81
      %p83 = scmp.ne.s32.totalorder %s72, %s73
      %p84 = scmp.eq.s32.totalorder %s24, 0
      %p85 = por %p83, %p84
      %p86 = scmp.ne.s32.totalorder %s72, %s73
      %p87 = scmp.eq.s32.totalorder %s25, 1
      %p88 = por %p86, %p87
      %p90 = scmp.ne.s32.totalorder %s73, %s89
      %p91 = scmp.eq.s32.totalorder %s25, 0
      %p92 = por %p90, %p91
      %s93 = ssub.s32 %s26, %s38
      %p94 = scmp.eq.s32.totalorder %s93, 0
      %s96 = sadd.s32 %s95, 1
      %s97 = scalar_select %p94, %s95, %s96
      %p100 = pneg %p94
      %p101 = scmp.eq.s32.totalorder %s19, 1
      %p102 = por %p100, %p101
      %p103 = scmp.ne.s32.totalorder %s95, %s98
      %p104 = scmp.eq.s32.totalorder %s19, 0
      %p105 = por %p103, %p104
      %p106 = scmp.ne.s32.totalorder %s95, %s98
      %p107 = scmp.eq.s32.totalorder %s24, 1
      %p108 = por %p106, %p107
      %p109 = scmp.ne.s32.totalorder %s98, %s99
      %p110 = scmp.eq.s32.totalorder %s24, 0
      %p111 = por %p109, %p110
      %p112 = scmp.ne.s32.totalorder %s98, %s99
      %p113 = scmp.eq.s32.totalorder %s25, 1
      %p114 = por %p112, %p113
      %p116 = scmp.ne.s32.totalorder %s99, %s115
      %p117 = scmp.eq.s32.totalorder %s25, 0
      %p118 = por %p116, %p117
      %s119 = ssub.s32 %s26, %s38
      %s120 = ssub.s32 %s27, %s34
      %s121 = sor.u32 %s119, %s120
      %p122 = scmp.eq.s32.totalorder %s121, 0
      %s124 = sadd.s32 %s123, 1
      %s125 = scalar_select %p122, %s123, %s124
      %p128 = pneg %p122
      %p129 = scmp.eq.s32.totalorder %s19, 1
      %p130 = por %p128, %p129
      %p131 = scmp.ne.s32.totalorder %s123, %s126
      %p132 = scmp.eq.s32.totalorder %s19, 0
      %p133 = por %p131, %p132
      %p134 = scmp.ne.s32.totalorder %s123, %s126
      %p135 = scmp.eq.s32.totalorder %s24, 1
      %p136 = por %p134, %p135
      %p137 = scmp.ne.s32.totalorder %s126, %s127
      %p138 = scmp.eq.s32.totalorder %s24, 0
      %p139 = por %p137, %p138
      %p140 = scmp.ne.s32.totalorder %s126, %s127
      %p141 = scmp.eq.s32.totalorder %s25, 1
      %p142 = por %p140, %p141
      %p144 = scmp.ne.s32.totalorder %s127, %s143
      %p145 = scmp.eq.s32.totalorder %s25, 0
      %p146 = por %p144, %p145
      %s147 = ssub.s32 %s26, %s38
      %p148 = scmp.eq.s32.totalorder %s147, 0
      %s150 = sadd.s32 %s149, 1
      %s151 = scalar_select %p148, %s149, %s150
      %p154 = pneg %p148
      %p155 = scmp.eq.s32.totalorder %s19, 1
      %p156 = por %p154, %p155
      %p157 = scmp.ne.s32.totalorder %s149, %s152
      %p158 = scmp.eq.s32.totalorder %s19, 0
      %p159 = por %p157, %p158
      %p160 = scmp.ne.s32.totalorder %s149, %s152
      %p161 = scmp.eq.s32.totalorder %s24, 1
      %p162 = por %p160, %p161
      %p163 = scmp.ne.s32.totalorder %s152, %s153
      %p164 = scmp.eq.s32.totalorder %s24, 0
      %p165 = por %p163, %p164
      %p166 = scmp.ne.s32.totalorder %s152, %s153
      %p167 = scmp.eq.s32.totalorder %s25, 1
      %p168 = por %p166, %p167
      %p170 = scmp.ne.s32.totalorder %s153, %s169
      %p171 = scmp.eq.s32.totalorder %s25, 0
      %p172 = por %p170, %p171
      %s174 = sadd.s32 %s173, 1
      %p177 = scmp.eq.s32.totalorder %s19, 1
      %p178 = scmp.ne.s32.totalorder %s173, %s175
      %p179 = scmp.eq.s32.totalorder %s19, 0
      %p180 = por %p178, %p179
      %p181 = scmp.ne.s32.totalorder %s173, %s175
      %p182 = scmp.eq.s32.totalorder %s24, 1
      %p183 = por %p181, %p182
      %p184 = scmp.ne.s32.totalorder %s175, %s176
      %p185 = scmp.eq.s32.totalorder %s24, 0
      %p186 = por %p184, %p185
      %p187 = scmp.ne.s32.totalorder %s175, %s176
      %p188 = scmp.eq.s32.totalorder %s25, 1
      %p189 = por %p187, %p188
      %p191 = scmp.ne.s32.totalorder %s176, %s190
      %p192 = scmp.eq.s32.totalorder %s25, 0
      %p193 = por %p191, %p192
      %s195 = sadd.s32 %s194, 1
      %p198 = scmp.eq.s32.totalorder %s19, 1
      %p199 = scmp.ne.s32.totalorder %s194, %s196
      %p200 = scmp.eq.s32.totalorder %s19, 0
      %p201 = por %p199, %p200
      %p202 = scmp.ne.s32.totalorder %s194, %s196
      %p203 = scmp.eq.s32.totalorder %s24, 1
      %p204 = por %p202, %p203
      %p205 = scmp.ne.s32.totalorder %s196, %s197
      %p206 = scmp.eq.s32.totalorder %s24, 0
      %p207 = por %p205, %p206
      %p208 = scmp.ne.s32.totalorder %s196, %s197
      %p209 = scmp.eq.s32.totalorder %s25, 1
      %p210 = por %p208, %p209
      %p212 = scmp.ne.s32.totalorder %s197, %s211
      %p213 = scmp.eq.s32.totalorder %s25, 0
      %p214 = por %p212, %p213
      %s216 = sadd.s32 %s215, 1
      %p219 = scmp.eq.s32.totalorder %s19, 1
      %p220 = scmp.ne.s32.totalorder %s215, %s217
      %p221 = scmp.eq.s32.totalorder %s19, 0
      %p222 = por %p220, %p221
      %p223 = scmp.ne.s32.totalorder %s215, %s217
      %p224 = scmp.eq.s32.totalorder %s24, 1
      %p225 = por %p223, %p224
      %p226 = scmp.ne.s32.totalorder %s217, %s218
      %p227 = scmp.eq.s32.totalorder %s24, 0
      %p228 = por %p226, %p227
      %p229 = scmp.ne.s32.totalorder %s217, %s218
      %p230 = scmp.eq.s32.totalorder %s25, 1
      %p231 = por %p229, %p230
      %p233 = scmp.ne.s32.totalorder %s218, %s232
      %p234 = scmp.eq.s32.totalorder %s25, 0
      %p235 = por %p233, %p234
      %s237 = sadd.s32 %s236, 1
      %p240 = scmp.eq.s32.totalorder %s19, 1
      %p241 = scmp.ne.s32.totalorder %s236, %s238
      %p242 = scmp.eq.s32.totalorder %s19, 0
      %p243 = por %p241, %p242
      %p244 = scmp.ne.s32.totalorder %s236, %s238
      %p245 = scmp.eq.s32.totalorder %s24, 1
      %p246 = por %p244, %p245
      %p247 = scmp.ne.s32.totalorder %s238, %s239
      %p248 = scmp.eq.s32.totalorder %s24, 0
      %p249 = por %p247, %p248
      %p250 = scmp.ne.s32.totalorder %s238, %s239
      %p251 = scmp.eq.s32.totalorder %s25, 1
      %p252 = por %p250, %p251
      %p254 = scmp.ne.s32.totalorder %s239, %s253
      %p255 = scmp.eq.s32.totalorder %s25, 0
      %p256 = por %p254, %p255
      %s258 = sadd.s32 %s257, 1
      %p261 = scmp.eq.s32.totalorder %s19, 1
      %p262 = scmp.ne.s32.totalorder %s257, %s259
      %p263 = scmp.eq.s32.totalorder %s19, 0
      %p264 = por %p262, %p263
      %p265 = scmp.ne.s32.totalorder %s257, %s259
      %p266 = scmp.eq.s32.totalorder %s24, 1
      %p267 = por %p265, %p266
      %p268 = scmp.ne.s32.totalorder %s259, %s260
      %p269 = scmp.eq.s32.totalorder %s24, 0
      %p270 = por %p268, %p269
      %p271 = scmp.ne.s32.totalorder %s259, %s260
      %p272 = scmp.eq.s32.totalorder %s25, 1
      %p273 = por %p271, %p272
      %p275 = scmp.ne.s32.totalorder %s260, %s274
      %p276 = scmp.eq.s32.totalorder %s25, 0
      %p277 = por %p275, %p276
      %s278 = ssub.s32 %s26, %s38
      %s279 = ssub.s32 %s27, %s34
      %s280 = sor.u32 %s278, %s279
      %p281 = scmp.eq.s32.totalorder %s280, 0
      %s283 = sadd.s32 %s282, 1
      %s284 = scalar_select %p281, %s282, %s283
      %p287 = pneg %p281
      %p288 = scmp.eq.s32.totalorder %s19, 1
      %p289 = por %p287, %p288
      %p290 = scmp.ne.s32.totalorder %s282, %s285
      %p291 = scmp.eq.s32.totalorder %s19, 0
      %p292 = por %p290, %p291
      %p293 = scmp.ne.s32.totalorder %s282, %s285
      %p294 = scmp.eq.s32.totalorder %s24, 1
      %p295 = por %p293, %p294
      %p296 = scmp.ne.s32.totalorder %s285, %s286
      %p297 = scmp.eq.s32.totalorder %s24, 0
      %p298 = por %p296, %p297
      %p299 = scmp.ne.s32.totalorder %s285, %s286
      %p300 = scmp.eq.s32.totalorder %s25, 1
      %p301 = por %p299, %p300
      %p303 = scmp.ne.s32.totalorder %s286, %s302
      %p304 = scmp.eq.s32.totalorder %s25, 0
      %p305 = por %p303, %p304
      %p306 = scmp.le.s32.totalorder 1, %s19
      %p307 = scmp.lt.s32.totalorder %s19, 3
      %p308 = pnand %p306, %p307
      %p309 = pneg %p308
      // Predicated region
      $region9: #{tpu_custom_call.1} parent=5 // pred_check
        _
      $region10: #{tpu_custom_call.1} parent=5 // pred_check_branch
        %311 = sbr.rel (%p308) target = $region12
      $region11: #{tpu_custom_call.1} parent=5 // pred_region
        %s312 = ssub.s32 %s19, 1
        // Predicated region
        $region13: #{tpu_custom_call.1} parent=11 // pred_check
          %p313 = pneg %p186
        $region14: #{tpu_custom_call.1} parent=11 // pred_check_branch
          %315 = sbr.rel (%p313) target = $region16
        $region15: #{tpu_custom_call.1} parent=11 // pred_region
          _
        $region16: #{tpu_custom_call.1} parent=11 // pred_fallthru
          _
        // Predicated region
        $region17: #{tpu_custom_call.1} parent=11 // pred_check
          %p316 = pneg %p207
        $region18: #{tpu_custom_call.1} parent=11 // pred_check_branch
          %318 = sbr.rel (%p316) target = $region20
        $region19: #{tpu_custom_call.1} parent=11 // pred_region
          _
        $region20: #{tpu_custom_call.1} parent=11 // pred_fallthru
          _
        // Predicated region
        $region21: #{tpu_custom_call.1} parent=11 // pred_check
          %p319 = pneg %p228
        $region22: #{tpu_custom_call.1} parent=11 // pred_check_branch
          %321 = sbr.rel (%p319) target = $region24
        $region23: #{tpu_custom_call.1} parent=11 // pred_region
          _
        $region24: #{tpu_custom_call.1} parent=11 // pred_fallthru
          _
        // Predicated region
        $region25: #{tpu_custom_call.1} parent=11 // pred_check
          %p322 = pneg %p249
        $region26: #{tpu_custom_call.1} parent=11 // pred_check_branch
          %324 = sbr.rel (%p322) target = $region28
        $region27: #{tpu_custom_call.1} parent=11 // pred_region
          _
        $region28: #{tpu_custom_call.1} parent=11 // pred_fallthru
          _
        // Predicated region
        $region29: #{tpu_custom_call.1} parent=11 // pred_check
          %p325 = pneg %p270
        $region30: #{tpu_custom_call.1} parent=11 // pred_check_branch
          %327 = sbr.rel (%p325) target = $region32
        $region31: #{tpu_custom_call.1} parent=11 // pred_region
          _
        $region32: #{tpu_custom_call.1} parent=11 // pred_fallthru
          _
      $region12: #{tpu_custom_call.1} parent=5 // pred_fallthru
        _
      %p328 = scmp.lt.s32.totalorder %s19, 2
      // Predicated region
      $region33: #{tpu_custom_call.1} parent=5 // pred_check
        %p329 = pneg %p328
      $region34: #{tpu_custom_call.1} parent=5 // pred_check_branch
        %331 = sbr.rel (%p329) target = $region36
      $region35: #{tpu_custom_call.1} parent=5 // pred_region
        // Predicated region
        $region37: #{tpu_custom_call.1} parent=35 // pred_check
          %p332 = pneg %p53
        $region38: #{tpu_custom_call.1} parent=35 // pred_check_branch
          %334 = sbr.rel (%p332) target = $region40
        $region39: #{tpu_custom_call.1} parent=35 // pred_region
          %p335 = scmp.lt.s32.totalorder %s26, 1
          %s336 = scalar_select %p335, %s26, 1
          %p337 = scmp.lt.s32.totalorder %s27, 0
          %s338 = scalar_select %p337, %s27, 0
          %s339 = sadd.s32 %s338, %s336
          %s340 = smul.addr %s339, 4
          %s341 = scalar_lea.vmem %s0, %s340
        $region40: #{tpu_custom_call.1} parent=35 // pred_fallthru
          _
        // Predicated region
        $region41: #{tpu_custom_call.1} parent=35 // pred_check
          %p342 = pneg %p79
        $region42: #{tpu_custom_call.1} parent=35 // pred_check_branch
          %344 = sbr.rel (%p342) target = $region44
        $region43: #{tpu_custom_call.1} parent=35 // pred_region
          %p345 = scmp.lt.s32.totalorder %s26, 1
          %s346 = scalar_select %p345, %s26, 1
          %s347 = smul.addr %s346, 2
          %s348 = smul.addr %s347, 8
          %s349 = scalar_lea.vmem %s1, %s348
        $region44: #{tpu_custom_call.1} parent=35 // pred_fallthru
          _
        // Predicated region
        $region45: #{tpu_custom_call.1} parent=35 // pred_check
          %p350 = pneg %p105
        $region46: #{tpu_custom_call.1} parent=35 // pred_check_branch
          %352 = sbr.rel (%p350) target = $region48
        $region47: #{tpu_custom_call.1} parent=35 // pred_region
          %p353 = scmp.lt.s32.totalorder %s26, 1
          %s354 = scalar_select %p353, %s26, 1
          %s355 = smul.addr %s354, 2
          %s356 = smul.addr %s355, 8
          %s357 = scalar_lea.vmem %s2, %s356
        $region48: #{tpu_custom_call.1} parent=35 // pred_fallthru
          _
        // Predicated region
        $region49: #{tpu_custom_call.1} parent=35 // pred_check
          %p358 = pneg %p133
        $region50: #{tpu_custom_call.1} parent=35 // pred_check_branch
          %360 = sbr.rel (%p358) target = $region52
        $region51: #{tpu_custom_call.1} parent=35 // pred_region
          %p361 = scmp.lt.s32.totalorder %s26, 1
          %s362 = scalar_select %p361, %s26, 1
          %p363 = scmp.lt.s32.totalorder %s27, 0
          %s364 = scalar_select %p363, %s27, 0
          %s365 = smul.addr %s362, 2
          %s366 = sadd.s32 %s364, %s365
          %s367 = smul.addr %s366, 8
          %s368 = scalar_lea.vmem %s3, %s367
        $region52: #{tpu_custom_call.1} parent=35 // pred_fallthru
          _
        // Predicated region
        $region53: #{tpu_custom_call.1} parent=35 // pred_check
          %p369 = pneg %p159
        $region54: #{tpu_custom_call.1} parent=35 // pred_check_branch
          %371 = sbr.rel (%p369) target = $region56
        $region55: #{tpu_custom_call.1} parent=35 // pred_region
          %p372 = scmp.lt.s32.totalorder %s26, 1
          %s373 = scalar_select %p372, %s26, 1
          %s374 = smul.addr %s373, 4
          %s375 = smul.addr %s374, 8
          %s376 = scalar_lea.vmem %s4, %s375
        $region56: #{tpu_custom_call.1} parent=35 // pred_fallthru
          _
      $region36: #{tpu_custom_call.1} parent=5 // pred_fallthru
        _
      %p377 = scmp.le.s32.totalorder 1, %s19
      %p378 = scmp.lt.s32.totalorder %s19, 3
      %p379 = pnand %p377, %p378
      %p380 = pneg %p379
      // Predicated region
      $region57: #{tpu_custom_call.1} parent=5 // pred_check
        _
      $region58: #{tpu_custom_call.1} parent=5 // pred_check_branch
        %382 = sbr.rel (%p379) target = $region60
      $region59: #{tpu_custom_call.1} parent=5 // pred_region
        %s383 = ssub.s32 %s19, 1
        %p384 = scmp.lt.s32.totalorder %s28, 1
        %s385 = scalar_select %p384, %s28, 1
        %p386 = scmp.lt.s32.totalorder %s29, 0
        %s387 = scalar_select %p386, %s29, 0
        %s388 = sadd.s32 %s387, %s385
        %s389 = smul.addr %s388, 4
        %s390 = scalar_lea.vmem %s0, %s389
        %p391 = pneg %p59
        %p392 = pneg %p56
        %p393 = scmp.lt.s32.totalorder %s28, 1
        %s394 = scalar_select %p393, %s28, 1
        %s395 = smul.addr %s394, 2
        %s396 = smul.addr %s395, 8
        %s397 = scalar_lea.vmem %s1, %s396
        %p398 = pneg %p85
        %p399 = pneg %p82
        %p400 = scmp.lt.s32.totalorder %s28, 1
        %s401 = scalar_select %p400, %s28, 1
        %s402 = smul.addr %s401, 2
        %s403 = smul.addr %s402, 8
        %s404 = scalar_lea.vmem %s2, %s403
        %p405 = pneg %p111
        %p406 = pneg %p108
        %p407 = scmp.lt.s32.totalorder %s28, 1
        %s408 = scalar_select %p407, %s28, 1
        %p409 = scmp.lt.s32.totalorder %s29, 0
        %s410 = scalar_select %p409, %s29, 0
        %s411 = smul.addr %s408, 2
        %s412 = sadd.s32 %s410, %s411
        %s413 = smul.addr %s412, 8
        %s414 = scalar_lea.vmem %s3, %s413
        %p415 = pneg %p139
        %p416 = pneg %p136
        %p417 = scmp.lt.s32.totalorder %s28, 1
        %s418 = scalar_select %p417, %s28, 1
        %s419 = smul.addr %s418, 4
        %s420 = smul.addr %s419, 8
        %s421 = scalar_lea.vmem %s4, %s420
        %p422 = pneg %p165
        %p423 = pneg %p162
        %p424 = pneg %p186
        %p425 = pneg %p183
        %p426 = pneg %p207
        %p427 = pneg %p204
        %p428 = pneg %p228
        %p429 = pneg %p225
        %p430 = pneg %p249
        %p431 = pneg %p246
        %p432 = pneg %p270
        %p433 = pneg %p267
        %p434 = pneg %p298
        %p435 = pneg %p295
        %s436 = sand.u32 %s285, 1
        %s437 = scalar_lea.sflag [#allocation3], %s436
        %s438 = sand.u32 %s285, 1
        %s439 = smul.addr %s438, 32
        %s440 = scalar_lea.vmem [#allocation2], %s439
        %p441 = scmp.lt.s32.totalorder %s28, 1
        %s442 = scalar_select %p441, %s28, 1
        %p443 = scmp.lt.s32.totalorder %s29, 0
        %s444 = scalar_select %p443, %s29, 0
        %s445 = sadd.s32 %s444, %s442
        %s446 = smul.addr %s445, 4
        %s447 = scalar_lea.vmem %s0, %s446
        %p448 = scmp.lt.s32.totalorder %s28, 1
        %s449 = scalar_select %p448, %s28, 1
        %s450 = smul.addr %s449, 2
        %s451 = smul.addr %s450, 8
        %s452 = scalar_lea.vmem %s1, %s451
        %p453 = scmp.lt.s32.totalorder %s28, 1
        %s454 = scalar_select %p453, %s28, 1
        %s455 = smul.addr %s454, 2
        %s456 = smul.addr %s455, 8
        %s457 = scalar_lea.vmem %s2, %s456
        %p458 = scmp.lt.s32.totalorder %s28, 1
        %s459 = scalar_select %p458, %s28, 1
        %p460 = scmp.lt.s32.totalorder %s29, 0
        %s461 = scalar_select %p460, %s29, 0
        %s462 = smul.addr %s459, 2
        %s463 = sadd.s32 %s461, %s462
        %s464 = smul.addr %s463, 8
        %s465 = scalar_lea.vmem %s3, %s464
        %p466 = scmp.lt.s32.totalorder %s28, 1
        %s467 = scalar_select %p466, %s28, 1
        %s468 = smul.addr %s467, 4
        %s469 = smul.addr %s468, 8
        %s470 = scalar_lea.vmem %s4, %s469
        %v472 = vld [vmem:[%s447] sm:$0x7]
        %v473 = vld [vmem:[%s452] sm:$0xff]
        %v474 = vld [vmem:[%s452 + $0x8] sm:$0xff]
        %v475 = vmul.f32 %v472, %v472
        %477 = vset.pattern.permute.xlu0 0
        %478 = vperm.xlu0 %477, %v473
        %v479 = vpop.permute.xlu0 %478
        %482 = vset.pattern.permute.xlu0 0
        %483 = vperm.xlu0 %482, %v474
        %v484 = vpop.permute.xlu0 %483
        %v486 = vlaneseq
        %v487 = vshrl.u32 %v486, 7
        %v488 = vsub.s32 0, %v487
        %v489 = vrot.slane %v472, %v488
        %v490 = vmul.f32 %v479, %v489
        %v491 = vmul.f32 %v484, %v489
        %v493 = vrot.slane %v475, 1
        %v495 = vadd.f32 %v475, %v493
        %496 = vset.pattern.permute.xlu0 1
        %497 = vperm.xlu0 %496, %v473
        %v498 = vpop.permute.xlu0 %497
        %500 = vset.pattern.permute.xlu0 1
        %501 = vperm.xlu0 %500, %v474
        %v502 = vpop.permute.xlu0 %501
        %v504 = vlaneseq
        %v505 = vshrl.u32 %v504, 7
        %v506 = vsub.s32 1, %v505
        %v507 = vrot.slane %v472, %v506
        %v508 = vmul.f32 %v498, %v507
        %v509 = vmul.f32 %v502, %v507
        %v510 = vadd.f32 %v490, %v508
        %v511 = vadd.f32 %v491, %v509
        %v512 = vrot.slane %v475, 2
        %v514 = vadd.f32 %v495, %v512
        %515 = vset.pattern.permute.xlu0 2
        %516 = vperm.xlu0 %515, %v473
        %v517 = vpop.permute.xlu0 %516
        %519 = vset.pattern.permute.xlu0 2
        %520 = vperm.xlu0 %519, %v474
        %v521 = vpop.permute.xlu0 %520
        %v523 = vlaneseq
        %v524 = vshrl.u32 %v523, 7
        %v525 = vsub.s32 2, %v524
        %v526 = vrot.slane %v472, %v525
        %v527 = vmul.f32 %v517, %v526
        %v528 = vmul.f32 %v521, %v526
        %v529 = vadd.f32 %v510, %v527
        %v530 = vadd.f32 %v511, %v528
        %v531 = vld [vmem:[%s457] sm:$0xff]
        %v532 = vld [vmem:[%s457 + $0x8] sm:$0xff]
        %534 = vset.pattern.permute.xlu0 0
        %535 = vperm.xlu0 %534, %v531
        %v536 = vpop.permute.xlu0 %535
        %539 = vset.pattern.permute.xlu0 0
        %540 = vperm.xlu0 %539, %v532
        %v541 = vpop.permute.xlu0 %540
        %v543 = vlaneseq
        %v544 = vshrl.u32 %v543, 7
        %v545 = vsub.s32 0, %v544
        %v546 = vrot.slane %v514, %v545
        %v547 = vadd.f32 %v536, %v546
        %v548 = vadd.f32 %v541, %v546
        %v549 = vmul.f32 %v529, 2.0
        %v550 = vmul.f32 %v530, 2.0
        %v551 = vsub.f32 %v547, %v549
        %v552 = vsub.f32 %v548, %v550
        %v553 = vmax.f32 %v551, 0.0
        %v554 = vmax.f32 %v552, 0.0
        %v555 = vlaneseq
        %v556 = vshrl.u32 %v555, 7
        %v557 = vadd.s32 %v556, 8
        %vm558 = vcmask 523264
        %v559 = vsel %vm558, %v553, inf
        %v560 = vsel %vm558, %v554, inf
        %v561 = vmin.f32 %v559, %v560
        %v562 = vrot.slane %v561, 4
        %v563 = vmin.f32 %v561, %v562
        %v564 = vrot.slane %v563, 2
        %v565 = vmin.f32 %v563, %v564
        %v566 = vrot.slane %v565, 1
        %v567 = vmin.f32 %v565, %v566
        %vm568 = vcmp.eq.f32.partialorder %v553, %v567
        %vm569 = vcmp.eq.f32.partialorder %v554, %v567
        %v570 = vsel %vm568, %v556, 16
        %v571 = vsel %vm569, %v557, 16
        %v572 = vsel %vm558, %v570, 2147483647
        %v573 = vsel %vm558, %v571, 2147483647
        %vm574 = vcmp.lt.s32.totalorder %v572, %v573
        %v575 = vsel %vm574, %v572, %v573
        %v576 = vrot.slane %v575, 4
        %vm577 = vcmp.lt.s32.totalorder %v575, %v576
        %v578 = vsel %vm577, %v575, %v576
        %v579 = vrot.slane %v578, 2
        %vm580 = vcmp.lt.s32.totalorder %v578, %v579
        %v581 = vsel %vm580, %v578, %v579
        %v582 = vrot.slane %v581, 1
        %vm583 = vcmp.lt.s32.totalorder %v581, %v582
        %v584 = vsel %vm583, %v581, %v582
        %vm585 = vcmp.eq.s32.totalorder %v556, %v584
        %vm586 = vcmp.eq.s32.totalorder %v557, %v584
        %v587 = vadd.f32 %v567, 1e-08
        %v588 = vrcp.pop %v587
        %v589 = vsel %vm585, %v588, 0.0
        %v590 = vsel %vm586, %v588, 0.0
        %v591 = vadd.f32 %v589, 0.0
        %v592 = vadd.f32 %v590, 0.0
        %v593 = vadd.f32 %v588, 0.0
        %v594 = vsel %vm585, 1e+30, %v553
        %v595 = vsel %vm586, 1e+30, %v554
        %v596 = vsel %vm558, %v594, inf
        %v597 = vsel %vm558, %v595, inf
        %v598 = vmin.f32 %v596, %v597
        %v599 = vrot.slane %v598, 4
        %v600 = vmin.f32 %v598, %v599
        %v601 = vrot.slane %v600, 2
        %v602 = vmin.f32 %v600, %v601
        %v603 = vrot.slane %v602, 1
        %v604 = vmin.f32 %v602, %v603
        %vm605 = vcmp.eq.f32.partialorder %v594, %v604
        %vm606 = vcmp.eq.f32.partialorder %v595, %v604
        %v607 = vsel %vm605, %v556, 16
        %v608 = vsel %vm606, %v557, 16
        %v609 = vsel %vm558, %v607, 2147483647
        %v610 = vsel %vm558, %v608, 2147483647
        %vm611 = vcmp.lt.s32.totalorder %v609, %v610
        %v612 = vsel %vm611, %v609, %v610
        %v613 = vrot.slane %v612, 4
        %vm614 = vcmp.lt.s32.totalorder %v612, %v613
        %v615 = vsel %vm614, %v612, %v613
        %v616 = vrot.slane %v615, 2
        %vm617 = vcmp.lt.s32.totalorder %v615, %v616
        %v618 = vsel %vm617, %v615, %v616
        %v619 = vrot.slane %v618, 1
        %vm620 = vcmp.lt.s32.totalorder %v618, %v619
        %v621 = vsel %vm620, %v618, %v619
        %vm622 = vcmp.eq.s32.totalorder %v556, %v621
        %vm623 = vcmp.eq.s32.totalorder %v557, %v621
        %v624 = vadd.f32 %v604, 1e-08
        %v625 = vrcp.pop %v624
        %v626 = vsel %vm622, %v625, 0.0
        %v627 = vsel %vm623, %v625, 0.0
        %v628 = vadd.f32 %v591, %v626
        %v629 = vadd.f32 %v592, %v627
        %v630 = vadd.f32 %v593, %v625
        %v631 = vsel %vm622, 1e+30, %v594
        %v632 = vsel %vm623, 1e+30, %v595
        %v633 = vsel %vm558, %v631, inf
        %v634 = vsel %vm558, %v632, inf
        %v635 = vmin.f32 %v633, %v634
        %v636 = vrot.slane %v635, 4
        %v637 = vmin.f32 %v635, %v636
        %v638 = vrot.slane %v637, 2
        %v639 = vmin.f32 %v637, %v638
        %v640 = vrot.slane %v639, 1
        %v641 = vmin.f32 %v639, %v640
        %vm642 = vcmp.eq.f32.partialorder %v631, %v641
        %vm643 = vcmp.eq.f32.partialorder %v632, %v641
        %v644 = vsel %vm642, %v556, 16
        %v645 = vsel %vm643, %v557, 16
        %v646 = vsel %vm558, %v644, 2147483647
        %v647 = vsel %vm558, %v645, 2147483647
        %vm648 = vcmp.lt.s32.totalorder %v646, %v647
        %v649 = vsel %vm648, %v646, %v647
        %v650 = vrot.slane %v649, 4
        %vm651 = vcmp.lt.s32.totalorder %v649, %v650
        %v652 = vsel %vm651, %v649, %v650
        %v653 = vrot.slane %v652, 2
        %vm654 = vcmp.lt.s32.totalorder %v652, %v653
        %v655 = vsel %vm654, %v652, %v653
        %v656 = vrot.slane %v655, 1
        %vm657 = vcmp.lt.s32.totalorder %v655, %v656
        %v658 = vsel %vm657, %v655, %v656
        %vm659 = vcmp.eq.s32.totalorder %v556, %v658
        %vm660 = vcmp.eq.s32.totalorder %v557, %v658
        %v661 = vadd.f32 %v641, 1e-08
        %v662 = vrcp.pop %v661
        %v663 = vsel %vm659, %v662, 0.0
        %v664 = vsel %vm660, %v662, 0.0
        %v665 = vadd.f32 %v628, %v663
        %v666 = vadd.f32 %v629, %v664
        %v667 = vadd.f32 %v630, %v662
        %v668 = vrcp.pop %v667
        %v669 = vld [vmem:[%s470] sm:$0xff]
        %v670 = vld [vmem:[%s470 + $0x8] sm:$0xff]
        %v671 = vld [vmem:[%s470 + $0x10] sm:$0xff]
        %v672 = vld [vmem:[%s470 + $0x18] sm:$0xff]
        %v673 = vpack.c.bf16 %v670, %v669
        %v674 = vpack.c.bf16 %v672, %v671
        %v675 = vpack.c.bf16 %v666, %v665
        %vm676 = vcmask 130048
        %v678 = vsel %vm676, %v673, 0
        %v681 = vsel %vm676, %v674, 0
        %683 = vmatprep.subr.bf16.mxu0 0
        %684 = vmatpush1.bf16.msra.mxu0 %v675
        %685 = vmatprep.subr.bf16.mxu0 0
        %686 = vmatpush1.bf16.msra.mxu0 0
        %687 = vmatprep.subr.bf16.mxu0 0
        %688 = vmatpush1.bf16.msra.mxu0 0
        %689 = vmatprep.subr.bf16.mxu0 0
        %690 = vmatpush1.bf16.msra.mxu0 0
        %691 = vmatprep.subr.bf16.mxu0 0
        %692 = vmatpush1.bf16.msra.mxu0 0
        %693 = vmatprep.subr.bf16.mxu0 0
        %694 = vmatpush1.bf16.msra.mxu0 0
        %695 = vmatprep.subr.bf16.mxu0 0
        %696 = vmatpush1.bf16.msra.mxu0 0
        %697 = vmatprep.subr.bf16.mxu0 0
        %698 = vmatpush1.bf16.msra.mxu0 0
        %699 = vmatprep.subr.bf16.mxu0 0
        %700 = vmatpush1.bf16.msra.mxu0 0
        %701 = vmatprep.subr.bf16.mxu0 0
        %702 = vmatpush1.bf16.msra.mxu0 0
        %703 = vmatprep.subr.bf16.mxu0 0
        %704 = vmatpush1.bf16.msra.mxu0 0
        %705 = vmatprep.subr.bf16.mxu0 0
        %706 = vmatpush1.bf16.msra.mxu0 0
        %707 = vmatprep.subr.bf16.mxu0 0
        %708 = vmatpush1.bf16.msra.mxu0 0
        %709 = vmatprep.subr.bf16.mxu0 0
        %710 = vmatpush1.bf16.msra.mxu0 0
        %711 = vmatprep.subr.bf16.mxu0 0
        %712 = vmatpush1.bf16.msra.mxu0 0
        %713 = vmatprep.subr.bf16.mxu0 0
        %714 = vmatpush1.bf16.msra.mxu0 0
        %715 = vmatprep.mubr.bf16.mxu0 0
        %716 = vmatmul.mubr.bf16.gmra.mrb[0].mxu0 %v678
        %v717 = vpop.f32.mrb[0].mxu0
        %v718 = vadd.f32 0.0, %v717
        %v719 = vpop.f32.mrb[0].mxu0
        %v720 = vpop.f32.mrb[0].mxu0
        %v721 = vadd.f32 0.0, %v720
        %v722 = vpop.f32.mrb[0].mxu0
        %723 = vmatprep.mubr.bf16.mxu0 0
        %724 = vmatmul.mubr.bf16.gmra.mrb[0].mxu0 %v681
        %v725 = vpop.f32.mrb[0].mxu0
        %v726 = vadd.f32 0.0, %v725
        %v727 = vpop.f32.mrb[0].mxu0
        %v728 = vpop.f32.mrb[0].mxu0
        %v729 = vadd.f32 0.0, %v728
        %v730 = vpop.f32.mrb[0].mxu0
        %731 = vdwg.mxu0
        %v732 = vmul.f32 %v718, %v668
        %v733 = vmul.f32 %v721, %v668
        %v734 = vmul.f32 %v726, %v668
        %v735 = vmul.f32 %v729, %v668
        %v736 = vpack.c.bf16 %v733, %v732
        %v737 = vpack.c.bf16 %v735, %v734
        %v738 = vld [vmem:[%s465] sm:$0xff]
        %v739 = vld [vmem:[%s465 + $0x8] sm:$0xff]
        %v740 = vpack.c.bf16 %v739, %v738
        %v741 = vld [vmem:[%s5] sm:$0xf]
        %v742 = vld [vmem:[%s5 + $0x4] sm:$0xf]
        %v743 = vld [vmem:[%s5 + $0x8] sm:$0xf]
        %v744 = vld [vmem:[%s5 + $0xc] sm:$0xf]
        %v745 = vld [vmem:[%s5 + $0x10] sm:$0xf]
        %v746 = vld [vmem:[%s5 + $0x14] sm:$0xf]
        %v747 = vld [vmem:[%s5 + $0x18] sm:$0xf]
        %v748 = vld [vmem:[%s5 + $0x1c] sm:$0xf]
        %v749 = vld [vmem:[%s6] sm:$0xf]
        %v750 = vld [vmem:[%s6 + $0x4] sm:$0xf]
        %v751 = vld [vmem:[%s6 + $0x8] sm:$0xf]
        %v752 = vld [vmem:[%s6 + $0xc] sm:$0xf]
        %v753 = vld [vmem:[%s6 + $0x10] sm:$0xf]
        %v754 = vld [vmem:[%s6 + $0x14] sm:$0xf]
        %v755 = vld [vmem:[%s6 + $0x18] sm:$0xf]
        %v756 = vld [vmem:[%s6 + $0x1c] sm:$0xf]
        %v765 = vunpack.c.l.b16 %v749
        %v766 = vunpack.c.l.b16 %v750
        %v767 = vunpack.c.l.b16 %v751
        %v768 = vunpack.c.l.b16 %v752
        %v769 = vunpack.c.l.b16 %v753
        %v770 = vunpack.c.l.b16 %v754
        %v771 = vunpack.c.l.b16 %v755
        %v772 = vunpack.c.l.b16 %v756
        %v773 = vpack.c.b16 %v766, %v765
        %v774 = vpack.c.b16 %v768, %v767
        %v775 = vpack.c.b16 %v770, %v769
        %v776 = vpack.c.b16 %v772, %v771
        %vm777 = vcmask 261120
        %v779 = vsel %vm777, %v773, 0
        %v782 = vsel %vm777, %v774, 0
        %v785 = vsel %vm777, %v775, 0
        %v788 = vsel %vm777, %v776, 0
        %790 = vmatprep.subr.bf16.mxu0 0
        %791 = vmatpush1.bf16.msra.mxu0 %v736
        %792 = vmatprep.subr.bf16.mxu0 0
        %793 = vmatpush1.bf16.msra.mxu0 %v737
        %794 = vmatprep.subr.bf16.mxu0 0
        %795 = vmatpush1.bf16.msra.mxu0 0
        %796 = vmatprep.subr.bf16.mxu0 0
        %797 = vmatpush1.bf16.msra.mxu0 0
        %798 = vmatprep.subr.bf16.mxu0 0
        %799 = vmatpush1.bf16.msra.mxu0 0
        %800 = vmatprep.subr.bf16.mxu0 0
        %801 = vmatpush1.bf16.msra.mxu0 0
        %802 = vmatprep.subr.bf16.mxu0 0
        %803 = vmatpush1.bf16.msra.mxu0 0
        %804 = vmatprep.subr.bf16.mxu0 0
        %805 = vmatpush1.bf16.msra.mxu0 0
        %806 = vmatprep.subr.bf16.mxu0 0
        %807 = vmatpush1.bf16.msra.mxu0 0
        %808 = vmatprep.subr.bf16.mxu0 0
        %809 = vmatpush1.bf16.msra.mxu0 0
        %810 = vmatprep.subr.bf16.mxu0 0
        %811 = vmatpush1.bf16.msra.mxu0 0
        %812 = vmatprep.subr.bf16.mxu0 0
        %813 = vmatpush1.bf16.msra.mxu0 0
        %814 = vmatprep.subr.bf16.mxu0 0
        %815 = vmatpush1.bf16.msra.mxu0 0
        %816 = vmatprep.subr.bf16.mxu0 0
        %817 = vmatpush1.bf16.msra.mxu0 0
        %818 = vmatprep.subr.bf16.mxu0 0
        %819 = vmatpush1.bf16.msra.mxu0 0
        %820 = vmatprep.subr.bf16.mxu0 0
        %821 = vmatpush1.bf16.msra.mxu0 0
        %822 = vmatprep.mubr.bf16.mxu0 0
        %823 = vmatmul.mubr.bf16.gmra.mrb[0].mxu0 %v779
        %v824 = vpop.f32.mrb[0].mxu0
        %v825 = vadd.f32 0.0, %v824
        %v826 = vpop.f32.mrb[0].mxu0
        %v827 = vpop.f32.mrb[0].mxu0
        %v828 = vadd.f32 0.0, %v827
        %v829 = vpop.f32.mrb[0].mxu0
        %830 = vmatprep.mubr.bf16.mxu0 0
        %831 = vmatmul.mubr.bf16.gmra.mrb[0].mxu0 %v782
        %v832 = vpop.f32.mrb[0].mxu0
        %v833 = vadd.f32 0.0, %v832
        %v834 = vpop.f32.mrb[0].mxu0
        %v835 = vpop.f32.mrb[0].mxu0
        %v836 = vadd.f32 0.0, %v835
        %v837 = vpop.f32.mrb[0].mxu0
        %838 = vmatprep.mubr.bf16.mxu0 0
        %839 = vmatmul.mubr.bf16.gmra.mrb[0].mxu0 %v785
        %v840 = vpop.f32.mrb[0].mxu0
        %v841 = vadd.f32 0.0, %v840
        %v842 = vpop.f32.mrb[0].mxu0
        %v843 = vpop.f32.mrb[0].mxu0
        %v844 = vadd.f32 0.0, %v843
        %v845 = vpop.f32.mrb[0].mxu0
        %846 = vmatprep.mubr.bf16.mxu0 0
        %847 = vmatmul.mubr.bf16.gmra.mrb[0].mxu0 %v788
        %v848 = vpop.f32.mrb[0].mxu0
        %v849 = vadd.f32 0.0, %v848
        %v850 = vpop.f32.mrb[0].mxu0
        %v851 = vpop.f32.mrb[0].mxu0
        %v852 = vadd.f32 0.0, %v851
        %v853 = vpop.f32.mrb[0].mxu0
        %854 = vdwg.mxu0
        %v863 = vunpack.c.l.b16 %v741
        %v864 = vunpack.c.l.b16 %v742
        %v865 = vunpack.c.l.b16 %v743
        %v866 = vunpack.c.l.b16 %v744
        %v867 = vunpack.c.l.b16 %v745
        %v868 = vunpack.c.l.b16 %v746
        %v869 = vunpack.c.l.b16 %v747
        %v870 = vunpack.c.l.b16 %v748
        %v871 = vpack.c.b16 %v864, %v863
        %v872 = vpack.c.b16 %v866, %v865
        %v873 = vpack.c.b16 %v868, %v867
        %v874 = vpack.c.b16 %v870, %v869
        %v876 = vsel %vm676, %v871, 0
        %v879 = vsel %vm676, %v872, 0
        %v882 = vsel %vm676, %v873, 0
        %v885 = vsel %vm676, %v874, 0
        %887 = vmatprep.subr.bf16.mxu0 0
        %888 = vmatpush1.bf16.msra.mxu0 %v740
        %889 = vmatprep.subr.bf16.mxu0 0
        %890 = vmatpush1.bf16.msra.mxu0 0
        %891 = vmatprep.subr.bf16.mxu0 0
        %892 = vmatpush1.bf16.msra.mxu0 0
        %893 = vmatprep.subr.bf16.mxu0 0
        %894 = vmatpush1.bf16.msra.mxu0 0
        %895 = vmatprep.subr.bf16.mxu0 0
        %896 = vmatpush1.bf16.msra.mxu0 0
        %897 = vmatprep.subr.bf16.mxu0 0
        %898 = vmatpush1.bf16.msra.mxu0 0
        %899 = vmatprep.subr.bf16.mxu0 0
        %900 = vmatpush1.bf16.msra.mxu0 0
        %901 = vmatprep.subr.bf16.mxu0 0
        %902 = vmatpush1.bf16.msra.mxu0 0
        %903 = vmatprep.subr.bf16.mxu0 0
        %904 = vmatpush1.bf16.msra.mxu0 0
        %905 = vmatprep.subr.bf16.mxu0 0
        %906 = vmatpush1.bf16.msra.mxu0 0
        %907 = vmatprep.subr.bf16.mxu0 0
        %908 = vmatpush1.bf16.msra.mxu0 0
        %909 = vmatprep.subr.bf16.mxu0 0
        %910 = vmatpush1.bf16.msra.mxu0 0
        %911 = vmatprep.subr.bf16.mxu0 0
        %912 = vmatpush1.bf16.msra.mxu0 0
        %913 = vmatprep.subr.bf16.mxu0 0
        %914 = vmatpush1.bf16.msra.mxu0 0
        %915 = vmatprep.subr.bf16.mxu0 0
        %916 = vmatpush1.bf16.msra.mxu0 0
        %917 = vmatprep.subr.bf16.mxu0 0
        %918 = vmatpush1.bf16.msra.mxu0 0
        %919 = vmatprep.mubr.bf16.mxu0 0
        %920 = vmatmul.mubr.bf16.gmra.mrb[0].mxu0 %v876
        %v921 = vpop.f32.mrb[0].mxu0
        %v922 = vadd.f32 %v825, %v921
        %v923 = vpop.f32.mrb[0].mxu0
        %v924 = vpop.f32.mrb[0].mxu0
        %v925 = vadd.f32 %v828, %v924
        %v926 = vpop.f32.mrb[0].mxu0
        %927 = vmatprep.mubr.bf16.mxu0 0
        %928 = vmatmul.mubr.bf16.gmra.mrb[0].mxu0 %v879
        %v929 = vpop.f32.mrb[0].mxu0
        %v930 = vadd.f32 %v833, %v929
        %v931 = vpop.f32.mrb[0].mxu0
        %v932 = vpop.f32.mrb[0].mxu0
        %v933 = vadd.f32 %v836, %v932
        %v934 = vpop.f32.mrb[0].mxu0
        %935 = vmatprep.mubr.bf16.mxu0 0
        %936 = vmatmul.mubr.bf16.gmra.mrb[0].mxu0 %v882
        %v937 = vpop.f32.mrb[0].mxu0
        %v938 = vadd.f32 %v841, %v937
        %v939 = vpop.f32.mrb[0].mxu0
        %v940 = vpop.f32.mrb[0].mxu0
        %v941 = vadd.f32 %v844, %v940
        %v942 = vpop.f32.mrb[0].mxu0
        %943 = vmatprep.mubr.bf16.mxu0 0
        %944 = vmatmul.mubr.bf16.gmra.mrb[0].mxu0 %v885
        %v945 = vpop.f32.mrb[0].mxu0
        %v946 = vadd.f32 %v849, %v945
        %v947 = vpop.f32.mrb[0].mxu0
        %v948 = vpop.f32.mrb[0].mxu0
        %v949 = vadd.f32 %v852, %v948
        %v950 = vpop.f32.mrb[0].mxu0
        %951 = vdwg.mxu0
        %v952 = vld [vmem:[%s7] sm:$0xff]
        %v953 = vld [vmem:[%s7 + $0x8] sm:$0xff]
        %v954 = vld [vmem:[%s7 + $0x10] sm:$0xff]
        %v955 = vld [vmem:[%s7 + $0x18] sm:$0xff]
        %v956 = vld [vmem:[%s7 + $0x20] sm:$0xff]
        %v957 = vld [vmem:[%s7 + $0x28] sm:$0xff]
        %v958 = vld [vmem:[%s7 + $0x30] sm:$0xff]
        %v959 = vld [vmem:[%s7 + $0x38] sm:$0xff]
        %961 = vset.pattern.permute.xlu0 0
        %962 = vperm.xlu0 %961, %v952
        %v963 = vpop.permute.xlu0 %962
        %966 = vset.pattern.permute.xlu0 0
        %967 = vperm.xlu0 %966, %v953
        %v968 = vpop.permute.xlu0 %967
        %971 = vset.pattern.permute.xlu0 0
        %972 = vperm.xlu0 %971, %v954
        %v973 = vpop.permute.xlu0 %972
        %976 = vset.pattern.permute.xlu0 0
        %977 = vperm.xlu0 %976, %v955
        %v978 = vpop.permute.xlu0 %977
        %981 = vset.pattern.permute.xlu0 0
        %982 = vperm.xlu0 %981, %v956
        %v983 = vpop.permute.xlu0 %982
        %986 = vset.pattern.permute.xlu0 0
        %987 = vperm.xlu0 %986, %v957
        %v988 = vpop.permute.xlu0 %987
        %991 = vset.pattern.permute.xlu0 0
        %992 = vperm.xlu0 %991, %v958
        %v993 = vpop.permute.xlu0 %992
        %996 = vset.pattern.permute.xlu0 0
        %997 = vperm.xlu0 %996, %v959
        %v998 = vpop.permute.xlu0 %997
        %v1000 = vadd.f32 %v922, %v963
        %v1001 = vadd.f32 %v925, %v968
        %v1002 = vadd.f32 %v930, %v973
        %v1003 = vadd.f32 %v933, %v978
        %v1004 = vadd.f32 %v938, %v983
        %v1005 = vadd.f32 %v941, %v988
        %v1006 = vadd.f32 %v946, %v993
        %v1007 = vadd.f32 %v949, %v998
        %v1008 = vmax.f32 %v1000, 0.0
        %v1009 = vmax.f32 %v1001, 0.0
        %v1010 = vmax.f32 %v1002, 0.0
        %v1011 = vmax.f32 %v1003, 0.0
        %v1012 = vmax.f32 %v1004, 0.0
        %v1013 = vmax.f32 %v1005, 0.0
        %v1014 = vmax.f32 %v1006, 0.0
        %v1015 = vmax.f32 %v1007, 0.0
        %v1016 = vld [vmem:[%s8] sm:$0xf]
        %v1017 = vld [vmem:[%s8 + $0x4] sm:$0xf]
        %v1018 = vld [vmem:[%s8 + $0x8] sm:$0xf]
        %v1019 = vld [vmem:[%s8 + $0xc] sm:$0xf]
        %v1020 = vld [vmem:[%s9] sm:$0xff]
        %v1021 = vld [vmem:[%s9 + $0x8] sm:$0xff]
        %v1022 = vld [vmem:[%s9 + $0x10] sm:$0xff]
        %v1023 = vld [vmem:[%s9 + $0x18] sm:$0xff]
        %v1024 = vpack.c.bf16 %v1009, %v1008
        %v1025 = vpack.c.bf16 %v1011, %v1010
        %v1026 = vpack.c.bf16 %v1013, %v1012
        %v1027 = vpack.c.bf16 %v1015, %v1014
        %1029 = vset.pattern.permute.xlu0 0
        %1030 = vperm.xlu0 %1029, %v1020
        %v1031 = vpop.permute.xlu0 %1030
        %1034 = vset.pattern.permute.xlu0 0
        %1035 = vperm.xlu0 %1034, %v1021
        %v1036 = vpop.permute.xlu0 %1035
        %1039 = vset.pattern.permute.xlu0 0
        %1040 = vperm.xlu0 %1039, %v1022
        %v1041 = vpop.permute.xlu0 %1040
        %1044 = vset.pattern.permute.xlu0 0
        %1045 = vperm.xlu0 %1044, %v1023
        %v1046 = vpop.permute.xlu0 %1045
        %v1052 = vunpack.c.l.b16 %v1016
        %v1053 = vunpack.c.l.b16 %v1017
        %v1054 = vunpack.c.l.b16 %v1018
        %v1055 = vunpack.c.l.b16 %v1019
        %v1056 = vpack.c.b16 %v1053, %v1052
        %v1057 = vpack.c.b16 %v1055, %v1054
        %v1059 = vsel %vm558, %v1056, 0
        %v1062 = vsel %vm558, %v1057, 0
        %1064 = vmatprep.subr.bf16.mxu0 0
        %1065 = vmatpush1.bf16.msra.mxu0 %v1024
        %1066 = vmatprep.subr.bf16.mxu0 0
        %1067 = vmatpush1.bf16.msra.mxu0 %v1025
        %1068 = vmatprep.subr.bf16.mxu0 0
        %1069 = vmatpush1.bf16.msra.mxu0 %v1026
        %1070 = vmatprep.subr.bf16.mxu0 0
        %1071 = vmatpush1.bf16.msra.mxu0 %v1027
        %1072 = vmatprep.subr.bf16.mxu0 0
        %1073 = vmatpush1.bf16.msra.mxu0 0
        %1074 = vmatprep.subr.bf16.mxu0 0
        %1075 = vmatpush1.bf16.msra.mxu0 0
        %1076 = vmatprep.subr.bf16.mxu0 0
        %1077 = vmatpush1.bf16.msra.mxu0 0
        %1078 = vmatprep.subr.bf16.mxu0 0
        %1079 = vmatpush1.bf16.msra.mxu0 0
        %1080 = vmatprep.subr.bf16.mxu0 0
        %1081 = vmatpush1.bf16.msra.mxu0 0
        %1082 = vmatprep.subr.bf16.mxu0 0
        %1083 = vmatpush1.bf16.msra.mxu0 0
        %1084 = vmatprep.subr.bf16.mxu0 0
        %1085 = vmatpush1.bf16.msra.mxu0 0
        %1086 = vmatprep.subr.bf16.mxu0 0
        %1087 = vmatpush1.bf16.msra.mxu0 0
        %1088 = vmatprep.subr.bf16.mxu0 0
        %1089 = vmatpush1.bf16.msra.mxu0 0
        %1090 = vmatprep.subr.bf16.mxu0 0
        %1091 = vmatpush1.bf16.msra.mxu0 0
        %1092 = vmatprep.subr.bf16.mxu0 0
        %1093 = vmatpush1.bf16.msra.mxu0 0
        %1094 = vmatprep.subr.bf16.mxu0 0
        %1095 = vmatpush1.bf16.msra.mxu0 0
        %1096 = vmatprep.mubr.bf16.mxu0 0
        %1097 = vmatmul.mubr.bf16.gmra.mrb[0].mxu0 %v1059
        %v1098 = vpop.f32.mrb[0].mxu0
        %v1099 = vadd.f32 %v1031, %v1098
        %v1100 = vpop.f32.mrb[0].mxu0
        %v1101 = vpop.f32.mrb[0].mxu0
        %v1102 = vadd.f32 %v1036, %v1101
        %v1103 = vpop.f32.mrb[0].mxu0
        %1104 = vmatprep.mubr.bf16.mxu0 0
        %1105 = vmatmul.mubr.bf16.gmra.mrb[0].mxu0 %v1062
        %v1106 = vpop.f32.mrb[0].mxu0
        %v1107 = vadd.f32 %v1041, %v1106
        %v1108 = vpop.f32.mrb[0].mxu0
        %v1109 = vpop.f32.mrb[0].mxu0
        %v1110 = vadd.f32 %v1046, %v1109
        %v1111 = vpop.f32.mrb[0].mxu0
        %1112 = vdwg.mxu0
        %v1113 = vmax.f32 %v1099, 0.0
        %v1114 = vmax.f32 %v1102, 0.0
        %v1115 = vmax.f32 %v1107, 0.0
        %v1116 = vmax.f32 %v1110, 0.0
        %1117 = vst.msk [vmem:[%s440] sm:$0xff] %vm558, %v1113
        %1118 = vst.msk [vmem:[%s440 + $0x8] sm:$0xff] %vm558, %v1114
        %1119 = vst.msk [vmem:[%s440 + $0x10] sm:$0xff] %vm558, %v1115
        %1120 = vst.msk [vmem:[%s440 + $0x18] sm:$0xff] %vm558, %v1116
        %s1121 = sand.u32 %s285, 1
        %s1122 = scalar_lea.sflag [#allocation3], %s1121
        %s1123 = sand.u32 %s285, 1
        %s1124 = smul.addr %s1123, 32
        %s1125 = scalar_lea.vmem [#allocation2], %s1124
        // Predicated region
        $region61: #{tpu_custom_call.1} parent=59 // pred_check
          %p1126 = pneg %p295
        $region62: #{tpu_custom_call.1} parent=59 // pred_check_branch
          %1128 = sbr.rel (%p1126) target = $region64
        $region63: #{tpu_custom_call.1} parent=59 // pred_region
          %s1130 = ssub.s32 512, 512
          %1131 = vsyncadd %s1122, %s1130
          %s1132 = smul.addr %s28, 4
          %s1133 = sadd.s32 %s29, %s1132
          %s1134 = smul.addr %s1133, 128
          %s1135 = scalar_lea.hbm %s10, %s1134
          %s1136 = sshll.u32 %s1125, 4
          %s1137 = int_to_ptr.vmem [resolvable:$true] %s1136
          %1142 = dma.vmem_to_hbm [thread:$0]  %s1137, 512, %s1135, %s1122, 128, 128, 8
        $region64: #{tpu_custom_call.1} parent=59 // pred_fallthru
          _
      $region60: #{tpu_custom_call.1} parent=5 // pred_fallthru
        _
      %p1143 = scmp.le.s32.totalorder 2, %s19
      // Predicated region
      $region65: #{tpu_custom_call.1} parent=5 // pred_check
        %p1144 = pneg %p1143
      $region66: #{tpu_custom_call.1} parent=5 // pred_check_branch
        %1146 = sbr.rel (%p1144) target = $region68
      $region67: #{tpu_custom_call.1} parent=5 // pred_region
        %s1147 = ssub.s32 %s19, 2
        // Predicated region
        $region69: #{tpu_custom_call.1} parent=67 // pred_check
          %p1148 = pneg %p301
        $region70: #{tpu_custom_call.1} parent=67 // pred_check_branch
          %1150 = sbr.rel (%p1148) target = $region72
        $region71: #{tpu_custom_call.1} parent=67 // pred_region
          %s1151 = sand.u32 %s286, 1
          %s1152 = scalar_lea.sflag [#allocation3], %s1151
          %s1153 = sand.u32 %s286, 1
          %s1154 = smul.addr %s1153, 32
          %s1155 = scalar_lea.vmem [#allocation2], %s1154
          %1156 = dma.done %s1152, 512
        $region72: #{tpu_custom_call.1} parent=67 // pred_fallthru
          _
      $region68: #{tpu_custom_call.1} parent=5 // pred_fallthru
        _
    $region6: #{tpu_custom_call.1} parent=1 // loop_footer
      %s23 = sadd.s32 1, %s19
    $region7: #{tpu_custom_call.1} parent=1 // loop_footer_branch
      %18 = sbr.rel target = $region3
    $region8: #{tpu_custom_call.1} parent=1 // loop_exit
      _
    %1157 = vsyncpa [#allocation3], 1
    %s1158 = scalar_lea.sflag [#allocation3], 1
    %1159 = vsyncpa %s1158, 1

</llo_original>
